<compile_context>
chip_gen: v6e
topology: v6e:2x2x1
jax: 0.10.0
libtpu: 0.0.40
codegen_flags: <defaults>
</compile_context>

<pallas_src>
import functools

import jax
import jax.numpy as jnp
from jax.experimental import pallas as pl
from jax.experimental.pallas import tpu as pltpu

LANE = 128          # TPU lane width (last dim)
BF16_SUBLANE = 16   # packed bf16 vreg is (16, 128)
TB_MAX = 256        # batch tile when the batch grid is used (large-B path)
VMEM_BUDGET = 32 * 1024 * 1024   # conservative: v7x default scoped VMEM


def _round_up(n, m):
    return ((n + m - 1) // m) * m


# ----------------------------------------------------------------------------
# Fused kernel: the entire MLP for one batch tile.
#   x_ref : (bx, Din)       f32   unpadded input rows for this tile
#   w_ref : (L+1, Dp, Dp)   bf16  BN/bias-folded, zero-padded weights (stacked)
#   b_ref : (L+1, 1, Dp)    f32   folded biases (stacked)
#   o_ref : (Bp, Dp)        f32   lane-dense padded output tile
#   h_ref : (Bp, Dp)        f32   scratch: zero-padded activation slab
# ----------------------------------------------------------------------------
def _fused_mlp_kernel(x_ref, w_ref, b_ref, o_ref, h_ref, *, num_hidden):
    # Zero-pad the input inside the kernel: zero the slab, then drop the real
    # rows/features into its top-left corner (static slices -> masked store).
    h_ref[...] = jnp.zeros_like(h_ref)
    bx, fx = x_ref.shape
    h_ref[:bx, :fx] = x_ref[...]
    h = h_ref[...]                                         # (Bp, Dp) f32

    for i in range(num_hidden + 1):                        # static unroll
        w = w_ref[i]                                       # (Dp, Dp) bf16
        z = jnp.dot(h.astype(w.dtype), w,
                    preferred_element_type=jnp.float32)    # MXU, f32 accum
        z = z + b_ref[i]                                   # f32 epilogue (v5e-safe)
        if i < num_hidden:
            z = jnp.maximum(z, 0.0)                        # ReLU on hidden layers
        h = z
    o_ref[...] = h.astype(o_ref.dtype)


def mlp_forward(params, x):
    """Eval-mode forward of MLPModel as a single fused pallas_call.

    x: (B, input_size) float.  Returns (B, output_size) f32.
    """
    B, Din = x.shape
    w_stack, b_stack = params["w_stack"], params["b_stack"]
    L1, Dp, _ = w_stack.shape
    num_hidden = L1 - 1
    x = x.astype(jnp.float32)   # no-op when already f32

    kernel = functools.partial(_fused_mlp_kernel, num_hidden=num_hidden)

    if B <= TB_MAX:
        # Small batch: gridless, every operand is one full VMEM block.
        bp = _round_up(max(B, BF16_SUBLANE), BF16_SUBLANE)
        grid = None
        in_specs = [pl.BlockSpec(memory_space=pltpu.MemorySpace.VMEM)] * 3
        out_specs = pl.BlockSpec(memory_space=pltpu.MemorySpace.VMEM)
        out_rows, blk_x_rows, scratch_rows = bp, B, bp
        dim_sem = None
    else:
        # Large batch: grid over batch tiles.  Weights/biases use a constant
        # index map (stay VMEM-resident across steps) so only activations
        # stream; "parallel" lets v7x shard tiles across its two TensorCores.
        tb = TB_MAX
        grid = (pl.cdiv(B, tb),)
        in_specs = [
            pl.BlockSpec((tb, Din), lambda i: (i, 0)),
            pl.BlockSpec((L1, Dp, Dp), lambda i: (0, 0, 0)),
            pl.BlockSpec((L1, 1, Dp), lambda i: (0, 0, 0)),
        ]
        out_specs = pl.BlockSpec((tb, Dp), lambda i: (i, 0))
        out_rows, blk_x_rows, scratch_rows = B, tb, tb
        dim_sem = ("parallel",)

    # Explicit VMEM budget for the "all weights resident as full blocks"
    # design (v7x: 64 MiB physical / 32 MiB default scoped, vs 128 MiB on
    # v5e/v6e).  If this trips, tile the weight stack over a layer/N grid
    # axis instead of loading every layer whole.
    w_bytes = w_stack.size * w_stack.dtype.itemsize
    b_bytes = b_stack.size * b_stack.dtype.itemsize
    x_bytes = blk_x_rows * Din * 4
    o_bytes = scratch_rows * Dp * 4
    s_bytes = scratch_rows * Dp * 4
    needed = 2 * (w_bytes + b_bytes + x_bytes + o_bytes) + s_bytes  # 2x: buffers
    assert needed <= VMEM_BUDGET, (
        "MLP weights + activation tile exceed the conservative VMEM budget; "
        "tile the stacked weights over a layer/N grid axis (required for "
        "large hidden sizes, especially on v7x's 64 MiB VMEM).")
    vmem_limit = int(min(max(2 * needed, 16 * 1024 * 1024), VMEM_BUDGET))

    if dim_sem is None:
        cparams = pltpu.CompilerParams(vmem_limit_bytes=vmem_limit)
    else:
        cparams = pltpu.CompilerParams(dimension_semantics=dim_sem,
                                       vmem_limit_bytes=vmem_limit)

    call_kwargs = dict(
        out_shape=jax.ShapeDtypeStruct((out_rows, Dp), jnp.float32),
        in_specs=in_specs,
        out_specs=out_specs,
        scratch_shapes=[pltpu.VMEM((scratch_rows, Dp), jnp.float32)],
        compiler_params=cparams,
    )
    if grid is not None:
        call_kwargs["grid"] = grid

    out_p = pl.pallas_call(kernel, **call_kwargs)(x, w_stack, b_stack)
    return out_p[:B, :params["output_size"]]


# ----------------------------------------------------------------------------
# Parameter construction: PyTorch-like Linear init + eval-mode BatchNorm1d
# running statistics; BN and bias folded into lane-padded bf16 weights, all
# layers padded to a common Dp and stacked into single operands.
# ----------------------------------------------------------------------------
def init_mlp_params(key, input_size, hidden_size, output_size, num_layers,
                    eps=1e-5):
    raw = []
    in_dim = input_size
    for _ in range(num_layers):
        key, kw, kb, kg, kbt, km, kv = jax.random.split(key, 7)
        bound = 1.0 / float(in_dim) ** 0.5
        w = jax.random.uniform(kw, (in_dim, hidden_size), jnp.float32,
                               -bound, bound)          # stored as W.T (in,out)
        b = jax.random.uniform(kb, (hidden_size,), jnp.float32, -bound, bound)
        # Non-trivial eval-mode BatchNorm1d affine + running statistics.
        gamma = 1.0 + 0.1 * jax.random.normal(kg, (hidden_size,), jnp.float32)
        beta = 0.1 * jax.random.normal(kbt, (hidden_size,), jnp.float32)
        mean = 0.1 * jax.random.normal(km, (hidden_size,), jnp.float32)
        var = jnp.abs(1.0 + 0.1 * jax.random.normal(kv, (hidden_size,),
                                                    jnp.float32))
        raw.append(dict(w=w, b=b, gamma=gamma, beta=beta, mean=mean, var=var,
                        relu=True))
        in_dim = hidden_size

    key, kw, kb = jax.random.split(key, 3)
    bound = 1.0 / float(hidden_size) ** 0.5
    w = jax.random.uniform(kw, (hidden_size, output_size), jnp.float32,
                           -bound, bound)
    b = jax.random.uniform(kb, (output_size,), jnp.float32, -bound, bound)
    raw.append(dict(w=w, b=b, gamma=None, beta=None, mean=None, var=None,
                    relu=False))

    # Fold eval-mode BN + bias, pad every layer to a common (Dp, Dp) slab,
    # cast weights to bf16, and stack into single operands (3 DMAs total).
    Dp = _round_up(max(input_size, hidden_size, output_size), LANE)
    ws, bs = [], []
    for p in raw:
        w, b = p["w"], p["b"]
        if p["gamma"] is not None:
            scale = p["gamma"] / jnp.sqrt(p["var"] + eps)
            shift = p["beta"] - p["mean"] * scale
            w = w * scale[None, :]
            b = b * scale + shift
        din, dout = w.shape
        wp = jnp.zeros((Dp, Dp), jnp.float32).at[:din, :dout].set(w)
        bp = jnp.zeros((1, Dp), jnp.float32).at[0, :dout].set(b)
        ws.append(wp.astype(jnp.bfloat16))   # bf16 MXU operands
        bs.append(bp)                        # keep bias/epilogue in f32
    w_stack = jnp.stack(ws)                  # (L+1, Dp, Dp) bf16
    b_stack = jnp.stack(bs)                  # (L+1, 1, Dp)  f32
    return dict(w_stack=w_stack, b_stack=b_stack, raw=raw,
                input_size=input_size, output_size=output_size)


# ----------------------------------------------------------------------------
# Pure-JAX references
# ----------------------------------------------------------------------------
def mlp_forward_ref_f32(params, x, eps=1e-5):
    """Full-precision reference of the original module (eval mode)."""
    h = x
    for p in params["raw"]:
        z = jnp.dot(h, p["w"], precision=jax.lax.Precision.HIGHEST) + p["b"]
        if p["gamma"] is not None:
            z = (z - p["mean"]) / jnp.sqrt(p["var"] + eps) * p["gamma"] + p["beta"]
        if p["relu"]:
            z = jnp.maximum(z, 0.0)
        h = z
    return h


def mlp_forward_ref_kernel_numerics(params, x):
    """Mimics the kernel's numerics (folded bf16 weights, f32 accumulation)."""
    B, Din = x.shape
    w_stack, b_stack = params["w_stack"], params["b_stack"]
    L1, Dp, _ = w_stack.shape
    Bp = _round_up(max(B, BF16_SUBLANE), BF16_SUBLANE)
    h = jnp.zeros((Bp, Dp), jnp.float32).at[:B, :Din].set(
        x.astype(jnp.float32))
    for i in range(L1):
        z = jnp.dot(h.astype(jnp.bfloat16).astype(jnp.float32),
                    w_stack[i].astype(jnp.float32),
                    precision=jax.lax.Precision.HIGHEST) + b_stack[i]
        if i < L1 - 1:
            z = jnp.maximum(z, 0.0)
        h = z
    return h[:B, :params["output_size"]]


if __name__ == "__main__":
    # Small shapes consistent with (batch_size, input_size) MLP input.
    batch, input_size, hidden_size, output_size, num_layers = 8, 16, 32, 4, 2
    dropout = 0.5  # identity in eval mode

    key = jax.random.PRNGKey(0)
    key, kx = jax.random.split(key)
    x = jax.random.normal(kx, (batch, input_size), jnp.float32)

    params = init_mlp_params(key, input_size, hidden_size, output_size,
                             num_layers)

    out = jax.block_until_ready(mlp_forward(params, x))
    assert out.shape == (batch, output_size)

    # Tight check vs. a reference with identical (bf16-operand) numerics.
    ref_tight = mlp_forward_ref_kernel_numerics(params, x)
    assert jnp.allclose(out, ref_tight, atol=1e-4, rtol=1e-4)

    # Loose check vs. the full-precision unfolded module semantics.
    ref_f32 = mlp_forward_ref_f32(params, x)
    assert jnp.allclose(out, ref_f32, atol=5e-2, rtol=5e-2)

    print("KERNEL_OK")
</pallas_src>

<mosaic_0001>
module attributes {stable_mosaic.version = 11 : i64} {
  func.func @_fused_mlp_kernel(%arg0: memref<8x16xf32, #tpu.memory_space<vmem>>, %arg1: memref<3x128x128xbf16, #tpu.memory_space<vmem>>, %arg2: memref<3x1x128xf32, #tpu.memory_space<vmem>>, %arg3: memref<16x128xf32, #tpu.memory_space<vmem>>, %arg4: memref<16x128xf32, #tpu.memory_space<vmem>>) attributes {dimension_semantics = [], scalar_prefetch = 0 : i64, scratch_operands = 1 : i64, tpu.core_type = #tpu.core_type<tc>} {
    %cst = arith.constant 0.000000e+00 : f32
    %0 = vector.broadcast %cst : f32 to vector<16x128xf32>
    %c0 = arith.constant 0 : index
    %c0_0 = arith.constant 0 : index
    %1 = vector.load %arg4[%c0, %c0_0] : memref<16x128xf32, #tpu.memory_space<vmem>>, vector<16x128xf32>
    tpu.vector_store %arg4[%c0, %c0_0], %0 {strides = array<i32>} : memref<16x128xf32, #tpu.memory_space<vmem>>, vector<16x128xf32>,
    %c0_1 = arith.constant 0 : index
    %c0_2 = arith.constant 0 : index
    %2 = vector.load %arg0[%c0_1, %c0_2] : memref<8x16xf32, #tpu.memory_space<vmem>>, vector<8x16xf32>
    %c0_3 = arith.constant 0 : index
    %c0_4 = arith.constant 0 : index
    %3 = vector.load %arg4[%c0_3, %c0_4] : memref<16x128xf32, #tpu.memory_space<vmem>>, vector<8x16xf32>
    tpu.vector_store %arg4[%c0_3, %c0_4], %2 {strides = array<i32>} : memref<16x128xf32, #tpu.memory_space<vmem>>, vector<8x16xf32>,
    %c0_5 = arith.constant 0 : index
    %c0_6 = arith.constant 0 : index
    %4 = vector.load %arg4[%c0_5, %c0_6] : memref<16x128xf32, #tpu.memory_space<vmem>>, vector<16x128xf32>
    %c0_7 = arith.constant 0 : index
    %c0_8 = arith.constant 0 : index
    %c0_9 = arith.constant 0 : index
    %5 = vector.load %arg1[%c0_7, %c0_8, %c0_9] : memref<3x128x128xbf16, #tpu.memory_space<vmem>>, vector<1x128x128xbf16>
    %6 = vector.shape_cast %5 : vector<1x128x128xbf16> to vector<128x128xbf16>
    %7 = arith.truncf %4 : vector<16x128xf32> to vector<16x128xbf16>
    %cst_10 = arith.constant dense<0.000000e+00> : vector<16x128xf32>
    %8 = tpu.matmul %7, %6, %cst_10 {dimension_numbers = #tpu.dot_dimension_numbers<[1], [0], [0], [1], [0, 0, 1, 1], [], []>} : vector<16x128xbf16>, vector<128x128xbf16>, vector<16x128xf32> -> vector<16x128xf32>
    %c0_11 = arith.constant 0 : index
    %c0_12 = arith.constant 0 : index
    %c0_13 = arith.constant 0 : index
    %9 = vector.load %arg2[%c0_11, %c0_12, %c0_13] : memref<3x1x128xf32, #tpu.memory_space<vmem>>, vector<1x1x128xf32>
    %10 = vector.shape_cast %9 : vector<1x1x128xf32> to vector<1x128xf32>
    %11 = vector.broadcast %10 : vector<1x128xf32> to vector<16x128xf32>
    %12 = arith.addf %8, %11 : vector<16x128xf32>
    %cst_14 = arith.constant 0.000000e+00 : f32
    %13 = vector.broadcast %cst_14 : f32 to vector<16x128xf32>
    %14 = arith.maximumf %12, %13 : vector<16x128xf32>
    %c1 = arith.constant 1 : index
    %c0_15 = arith.constant 0 : index
    %c0_16 = arith.constant 0 : index
    %15 = vector.load %arg1[%c1, %c0_15, %c0_16] : memref<3x128x128xbf16, #tpu.memory_space<vmem>>, vector<1x128x128xbf16>
    %16 = vector.shape_cast %15 : vector<1x128x128xbf16> to vector<128x128xbf16>
    %17 = arith.truncf %14 : vector<16x128xf32> to vector<16x128xbf16>
    %cst_17 = arith.constant dense<0.000000e+00> : vector<16x128xf32>
    %18 = tpu.matmul %17, %16, %cst_17 {dimension_numbers = #tpu.dot_dimension_numbers<[1], [0], [0], [1], [0, 0, 1, 1], [], []>} : vector<16x128xbf16>, vector<128x128xbf16>, vector<16x128xf32> -> vector<16x128xf32>
    %c1_18 = arith.constant 1 : index
    %c0_19 = arith.constant 0 : index
    %c0_20 = arith.constant 0 : index
    %19 = vector.load %arg2[%c1_18, %c0_19, %c0_20] : memref<3x1x128xf32, #tpu.memory_space<vmem>>, vector<1x1x128xf32>
    %20 = vector.shape_cast %19 : vector<1x1x128xf32> to vector<1x128xf32>
    %21 = vector.broadcast %20 : vector<1x128xf32> to vector<16x128xf32>
    %22 = arith.addf %18, %21 : vector<16x128xf32>
    %cst_21 = arith.constant 0.000000e+00 : f32
    %23 = vector.broadcast %cst_21 : f32 to vector<16x128xf32>
    %24 = arith.maximumf %22, %23 : vector<16x128xf32>
    %c2 = arith.constant 2 : index
    %c0_22 = arith.constant 0 : index
    %c0_23 = arith.constant 0 : index
    %25 = vector.load %arg1[%c2, %c0_22, %c0_23] : memref<3x128x128xbf16, #tpu.memory_space<vmem>>, vector<1x128x128xbf16>
    %26 = vector.shape_cast %25 : vector<1x128x128xbf16> to vector<128x128xbf16>
    %27 = arith.truncf %24 : vector<16x128xf32> to vector<16x128xbf16>
    %cst_24 = arith.constant dense<0.000000e+00> : vector<16x128xf32>
    %28 = tpu.matmul %27, %26, %cst_24 {dimension_numbers = #tpu.dot_dimension_numbers<[1], [0], [0], [1], [0, 0, 1, 1], [], []>} : vector<16x128xbf16>, vector<128x128xbf16>, vector<16x128xf32> -> vector<16x128xf32>
    %c2_25 = arith.constant 2 : index
    %c0_26 = arith.constant 0 : index
    %c0_27 = arith.constant 0 : index
    %29 = vector.load %arg2[%c2_25, %c0_26, %c0_27] : memref<3x1x128xf32, #tpu.memory_space<vmem>>, vector<1x1x128xf32>
    %30 = vector.shape_cast %29 : vector<1x1x128xf32> to vector<1x128xf32>
    %31 = vector.broadcast %30 : vector<1x128xf32> to vector<16x128xf32>
    %32 = arith.addf %28, %31 : vector<16x128xf32>
    %c0_28 = arith.constant 0 : index
    %c0_29 = arith.constant 0 : index
    %33 = vector.load %arg3[%c0_28, %c0_29] : memref<16x128xf32, #tpu.memory_space<vmem>>, vector<16x128xf32>
    tpu.vector_store %arg3[%c0_28, %c0_29], %32 {strides = array<i32>} : memref<16x128xf32, #tpu.memory_space<vmem>>, vector<16x128xf32>,
    return
  }
}

</mosaic_0001>

<llo_original>
// kernel: tpu_custom_call.1
$region0: #{tpu_custom_call.1}
  #allocation0 [shape = 'u32[]', space=smem, size = 0x4, offset = 0x4, fixed_abs, tag = 'smem constant byte address 0x4 - core index']
  #allocation1 [shape = 'u32[144,128]{1,0:T(1,128)}', space=vmem, size = 0x12000, scoped, tag = 'internal scratch']
  #allocation2 [shape = 'f32[16,128]{1,0:T(8,128)}', space=vmem, size = 0x2000, scoped, tag = 'scratch operand']
  %s0 = inlined_call_operand.hbm [shape: f32[8,16], index: 0, kind: input, shape index: {}]
  %s1 = inlined_call_operand.hbm [shape: bf16[3,128,128], index: 1, kind: input, shape index: {}]
  %s2 = inlined_call_operand.vmem [shape: f32[3,1,128], index: 2, kind: input, shape index: {}]
  %s3 = inlined_call_operand.hbm [shape: f32[16,128], index: 3, kind: output, shape index: {}]
  %s4 = sld [smem:[#allocation0]]
  $region30: #{tpu_custom_call.1} parent=0
    _
  %s6 = ssub.s32 1, %s4
  %s7 = scalar_select 0, %s6, %s4
  $region1: #{tpu_custom_call.1} parent=0
    #allocation3 [shape = 'u8[4096]{0}', space=vmem, size = 0x1000, scoped, tag = 'input window, operand 0, single buffered']
    #allocation4 [shape = 's32[1]{0}', space=sflag, size = 0x4, scoped, tag = 'scoped memory for tpu_custom_call.1']
    #allocation5 [shape = 's32[1]{0}', space=sflag, size = 0x4, scoped, tag = 'scoped memory for tpu_custom_call.1']
    #allocation6 [shape = 'u8[98304]{0}', space=vmem, size = 0x18000, scoped, tag = 'input window, operand 1, single buffered']
    #allocation7 [shape = 's32[1]{0}', space=sflag, size = 0x4, scoped, tag = 'scoped memory for tpu_custom_call.1']
    #allocation8 [shape = 'u8[8192]{0}', space=vmem, size = 0x2000, scoped, tag = 'output window, operand 0, single buffered']
    %8 = vsyncpa [#allocation4], 0
    %9 = vsyncpa [#allocation7], 0
    %10 = vsyncpa [#allocation5], 0
    // Predicated region
    $region2: #{tpu_custom_call.1} parent=1 // pred_check
      _
    $region3: #{tpu_custom_call.1} parent=1 // pred_check_branch
      %12 = sbr.rel (0) target = $region5
    $region4: #{tpu_custom_call.1} parent=1 // pred_region
      %s14 = ssub.s32 128, 128
      %15 = vsyncadd [#allocation4], %s14
      %s17 = sshll.u32 [#allocation3], 4
      %s18 = int_to_ptr.vmem [resolvable:$true] %s17
      %20 = dma.hbm_to_vmem [thread:$0]  %s0, 128, %s18, [#allocation4]
    $region5: #{tpu_custom_call.1} parent=1 // pred_fallthru
      _
    // Predicated region
    $region6: #{tpu_custom_call.1} parent=1 // pred_check
      _
    $region7: #{tpu_custom_call.1} parent=1 // pred_check_branch
      %22 = sbr.rel (0) target = $region9
    $region8: #{tpu_custom_call.1} parent=1 // pred_region
      %s24 = ssub.s32 3072, 3072
      %25 = vsyncadd [#allocation7], %s24
      %s26 = sshll.u32 [#allocation6], 4
      %s27 = int_to_ptr.vmem [resolvable:$true] %s26
      %32 = dma.hbm_to_vmem [thread:$0]  %s1, 3072, %s27, [#allocation7], 64, 64, 4
    $region9: #{tpu_custom_call.1} parent=1 // pred_fallthru
      _
    // Predicated region
    $region10: #{tpu_custom_call.1} parent=1 // pred_check
      _
    $region11: #{tpu_custom_call.1} parent=1 // pred_check_branch
      %34 = sbr.rel (0) target = $region13
    $region12: #{tpu_custom_call.1} parent=1 // pred_region
      _
    $region13: #{tpu_custom_call.1} parent=1 // pred_fallthru
      _
    // Predicated region
    $region14: #{tpu_custom_call.1} parent=1 // pred_check
      _
    $region15: #{tpu_custom_call.1} parent=1 // pred_check_branch
      %36 = sbr.rel (0) target = $region17
    $region16: #{tpu_custom_call.1} parent=1 // pred_region
      %37 = dma.done [#allocation4], 128
    $region17: #{tpu_custom_call.1} parent=1 // pred_fallthru
      _
    // Predicated region
    $region18: #{tpu_custom_call.1} parent=1 // pred_check
      _
    $region19: #{tpu_custom_call.1} parent=1 // pred_check_branch
      %39 = sbr.rel (0) target = $region21
    $region20: #{tpu_custom_call.1} parent=1 // pred_region
      %40 = dma.done [#allocation7], 3072
    $region21: #{tpu_custom_call.1} parent=1 // pred_fallthru
      _
    %42 = vst [vmem:[#allocation2] sm:$0xff] 0.0
    %43 = vst [vmem:[#allocation2 + $0x8] sm:$0xff] 0.0
    %v44 = vld [vmem:[#allocation3] sm:$0xff]
    %vm45 = vcmask 130048
    %46 = vst.msk [vmem:[#allocation2] sm:$0xff] %vm45, %v44
    %v47 = vld [vmem:[#allocation2] sm:$0xff]
    %v48 = vld [vmem:[#allocation2 + $0x8] sm:$0xff]
    %v49 = vld [vmem:[#allocation6] sm:$0xf]
    %v50 = vld [vmem:[#allocation6 + $0x4] sm:$0xf]
    %v51 = vld [vmem:[#allocation6 + $0x8] sm:$0xf]
    %v52 = vld [vmem:[#allocation6 + $0xc] sm:$0xf]
    %v53 = vld [vmem:[#allocation6 + $0x10] sm:$0xf]
    %v54 = vld [vmem:[#allocation6 + $0x14] sm:$0xf]
    %v55 = vld [vmem:[#allocation6 + $0x18] sm:$0xf]
    %v56 = vld [vmem:[#allocation6 + $0x1c] sm:$0xf]
    %v57 = vld [vmem:[#allocation6 + $0x20] sm:$0xf]
    %v58 = vld [vmem:[#allocation6 + $0x24] sm:$0xf]
    %v59 = vld [vmem:[#allocation6 + $0x28] sm:$0xf]
    %v60 = vld [vmem:[#allocation6 + $0x2c] sm:$0xf]
    %v61 = vld [vmem:[#allocation6 + $0x30] sm:$0xf]
    %v62 = vld [vmem:[#allocation6 + $0x34] sm:$0xf]
    %v63 = vld [vmem:[#allocation6 + $0x38] sm:$0xf]
    %v64 = vld [vmem:[#allocation6 + $0x3c] sm:$0xf]
    %v65 = vpack.c.bf16 %v48, %v47
    %v66 = vld [vmem:[%s2] sm:$0x1]
    %v68 = vlaneseq
    %v69 = vshrl.u32 %v68, 7
    %v70 = vsub.s32 0, %v69
    %v71 = vrot.slane %v66, %v70
    %v89 = vunpack.c.l.b16 %v49
    %v90 = vunpack.c.l.b16 %v50
    %v91 = vunpack.c.l.b16 %v51
    %v92 = vunpack.c.l.b16 %v52
    %v93 = vunpack.c.l.b16 %v53
    %v94 = vunpack.c.l.b16 %v54
    %v95 = vunpack.c.l.b16 %v55
    %v96 = vunpack.c.l.b16 %v56
    %v97 = vunpack.c.l.b16 %v57
    %v98 = vunpack.c.l.b16 %v58
    %v99 = vunpack.c.l.b16 %v59
    %v100 = vunpack.c.l.b16 %v60
    %v101 = vunpack.c.l.b16 %v61
    %v102 = vunpack.c.l.b16 %v62
    %v103 = vunpack.c.l.b16 %v63
    %v104 = vunpack.c.l.b16 %v64
    %v105 = vpack.c.b16 %v90, %v89
    %v106 = vpack.c.b16 %v92, %v91
    %v107 = vpack.c.b16 %v94, %v93
    %v108 = vpack.c.b16 %v96, %v95
    %v109 = vpack.c.b16 %v98, %v97
    %v110 = vpack.c.b16 %v100, %v99
    %v111 = vpack.c.b16 %v102, %v101
    %v112 = vpack.c.b16 %v104, %v103
    %121 = vmatprep.subr.bf16.mxu0 0
    %122 = vmatpush1.bf16.msra.mxu0 %v112
    %123 = vmatprep.subr.bf16.mxu0 0
    %124 = vmatpush1.bf16.msra.mxu0 %v111
    %125 = vmatprep.subr.bf16.mxu0 0
    %126 = vmatpush1.bf16.msra.mxu0 %v110
    %127 = vmatprep.subr.bf16.mxu0 0
    %128 = vmatpush1.bf16.msra.mxu0 %v109
    %129 = vmatprep.subr.bf16.mxu0 0
    %130 = vmatpush1.bf16.msra.mxu0 %v108
    %131 = vmatprep.subr.bf16.mxu0 0
    %132 = vmatpush1.bf16.msra.mxu0 %v107
    %133 = vmatprep.subr.bf16.mxu0 0
    %134 = vmatpush1.bf16.msra.mxu0 %v106
    %135 = vmatprep.subr.bf16.mxu0 0
    %136 = vmatpush1.bf16.msra.mxu0 %v105
    %137 = vmatprep.subr.bf16.mxu0 0
    %138 = vmatpush2.bf16.msra.mxu0 0
    %139 = vmatprep.subr.bf16.mxu0 0
    %140 = vmatpush2.bf16.msra.mxu0 0
    %141 = vmatprep.subr.bf16.mxu0 0
    %142 = vmatpush2.bf16.msra.mxu0 0
    %143 = vmatprep.subr.bf16.mxu0 0
    %144 = vmatpush2.bf16.msra.mxu0 0
    %145 = vmatprep.subr.bf16.mxu0 0
    %146 = vmatpush2.bf16.msra.mxu0 0
    %147 = vmatprep.subr.bf16.mxu0 0
    %148 = vmatpush2.bf16.msra.mxu0 0
    %149 = vmatprep.subr.bf16.mxu0 0
    %150 = vmatpush2.bf16.msra.mxu0 0
    %151 = vmatprep.subr.bf16.mxu0 0
    %152 = vmatpush2.bf16.msra.mxu0 0
    %153 = vmatprep.mubr.bf16.mxu0 0
    %154 = vmatmul.mubr.bf16.gmra.mxu0 %v65
    %v155 = vpop.f32.mrf.mxu0
    %v156 = vadd.f32 %v71, %v155
    %v157 = vpop.f32.mrf.mxu0
    %v158 = vpop.f32.mrf.mxu0
    %v159 = vadd.f32 %v71, %v158
    %v160 = vpop.f32.mrf.mxu0
    %161 = vdwg.mxu0
    %v162 = vmax.f32 %v156, 0.0
    %v163 = vmax.f32 %v159, 0.0
    %s164 = scalar_lea.vmem [#allocation6], 64
    %v165 = vld [vmem:[%s164] sm:$0xf]
    %v166 = vld [vmem:[%s164 + $0x4] sm:$0xf]
    %v167 = vld [vmem:[%s164 + $0x8] sm:$0xf]
    %v168 = vld [vmem:[%s164 + $0xc] sm:$0xf]
    %v169 = vld [vmem:[%s164 + $0x10] sm:$0xf]
    %v170 = vld [vmem:[%s164 + $0x14] sm:$0xf]
    %v171 = vld [vmem:[%s164 + $0x18] sm:$0xf]
    %v172 = vld [vmem:[%s164 + $0x1c] sm:$0xf]
    %v173 = vld [vmem:[%s164 + $0x20] sm:$0xf]
    %v174 = vld [vmem:[%s164 + $0x24] sm:$0xf]
    %v175 = vld [vmem:[%s164 + $0x28] sm:$0xf]
    %v176 = vld [vmem:[%s164 + $0x2c] sm:$0xf]
    %v177 = vld [vmem:[%s164 + $0x30] sm:$0xf]
    %v178 = vld [vmem:[%s164 + $0x34] sm:$0xf]
    %v179 = vld [vmem:[%s164 + $0x38] sm:$0xf]
    %v180 = vld [vmem:[%s164 + $0x3c] sm:$0xf]
    %v181 = vpack.c.bf16 %v163, %v162
    %s182 = scalar_lea.vmem %s2, 1
    %v183 = vld [vmem:[%s182] sm:$0x1]
    %v185 = vlaneseq
    %v186 = vshrl.u32 %v185, 7
    %v187 = vsub.s32 0, %v186
    %v188 = vrot.slane %v183, %v187
    %v206 = vunpack.c.l.b16 %v165
    %v207 = vunpack.c.l.b16 %v166
    %v208 = vunpack.c.l.b16 %v167
    %v209 = vunpack.c.l.b16 %v168
    %v210 = vunpack.c.l.b16 %v169
    %v211 = vunpack.c.l.b16 %v170
    %v212 = vunpack.c.l.b16 %v171
    %v213 = vunpack.c.l.b16 %v172
    %v214 = vunpack.c.l.b16 %v173
    %v215 = vunpack.c.l.b16 %v174
    %v216 = vunpack.c.l.b16 %v175
    %v217 = vunpack.c.l.b16 %v176
    %v218 = vunpack.c.l.b16 %v177
    %v219 = vunpack.c.l.b16 %v178
    %v220 = vunpack.c.l.b16 %v179
    %v221 = vunpack.c.l.b16 %v180
    %v222 = vpack.c.b16 %v207, %v206
    %v223 = vpack.c.b16 %v209, %v208
    %v224 = vpack.c.b16 %v211, %v210
    %v225 = vpack.c.b16 %v213, %v212
    %v226 = vpack.c.b16 %v215, %v214
    %v227 = vpack.c.b16 %v217, %v216
    %v228 = vpack.c.b16 %v219, %v218
    %v229 = vpack.c.b16 %v221, %v220
    %238 = vmatprep.subr.bf16.mxu0 0
    %239 = vmatpush1.bf16.msra.mxu0 %v229
    %240 = vmatprep.subr.bf16.mxu0 0
    %241 = vmatpush1.bf16.msra.mxu0 %v228
    %242 = vmatprep.subr.bf16.mxu0 0
    %243 = vmatpush1.bf16.msra.mxu0 %v227
    %244 = vmatprep.subr.bf16.mxu0 0
    %245 = vmatpush1.bf16.msra.mxu0 %v226
    %246 = vmatprep.subr.bf16.mxu0 0
    %247 = vmatpush1.bf16.msra.mxu0 %v225
    %248 = vmatprep.subr.bf16.mxu0 0
    %249 = vmatpush1.bf16.msra.mxu0 %v224
    %250 = vmatprep.subr.bf16.mxu0 0
    %251 = vmatpush1.bf16.msra.mxu0 %v223
    %252 = vmatprep.subr.bf16.mxu0 0
    %253 = vmatpush1.bf16.msra.mxu0 %v222
    %254 = vmatprep.subr.bf16.mxu0 0
    %255 = vmatpush2.bf16.msra.mxu0 0
    %256 = vmatprep.subr.bf16.mxu0 0
    %257 = vmatpush2.bf16.msra.mxu0 0
    %258 = vmatprep.subr.bf16.mxu0 0
    %259 = vmatpush2.bf16.msra.mxu0 0
    %260 = vmatprep.subr.bf16.mxu0 0
    %261 = vmatpush2.bf16.msra.mxu0 0
    %262 = vmatprep.subr.bf16.mxu0 0
    %263 = vmatpush2.bf16.msra.mxu0 0
    %264 = vmatprep.subr.bf16.mxu0 0
    %265 = vmatpush2.bf16.msra.mxu0 0
    %266 = vmatprep.subr.bf16.mxu0 0
    %267 = vmatpush2.bf16.msra.mxu0 0
    %268 = vmatprep.subr.bf16.mxu0 0
    %269 = vmatpush2.bf16.msra.mxu0 0
    %270 = vmatprep.mubr.bf16.mxu0 0
    %271 = vmatmul.mubr.bf16.gmra.mxu0 %v181
    %v272 = vpop.f32.mrf.mxu0
    %v273 = vadd.f32 %v188, %v272
    %v274 = vpop.f32.mrf.mxu0
    %v275 = vpop.f32.mrf.mxu0
    %v276 = vadd.f32 %v188, %v275
    %v277 = vpop.f32.mrf.mxu0
    %278 = vdwg.mxu0
    %v279 = vmax.f32 %v273, 0.0
    %v280 = vmax.f32 %v276, 0.0
    %s281 = scalar_lea.vmem [#allocation6], 128
    %v282 = vld [vmem:[%s281] sm:$0xf]
    %v283 = vld [vmem:[%s281 + $0x4] sm:$0xf]
    %v284 = vld [vmem:[%s281 + $0x8] sm:$0xf]
    %v285 = vld [vmem:[%s281 + $0xc] sm:$0xf]
    %v286 = vld [vmem:[%s281 + $0x10] sm:$0xf]
    %v287 = vld [vmem:[%s281 + $0x14] sm:$0xf]
    %v288 = vld [vmem:[%s281 + $0x18] sm:$0xf]
    %v289 = vld [vmem:[%s281 + $0x1c] sm:$0xf]
    %v290 = vld [vmem:[%s281 + $0x20] sm:$0xf]
    %v291 = vld [vmem:[%s281 + $0x24] sm:$0xf]
    %v292 = vld [vmem:[%s281 + $0x28] sm:$0xf]
    %v293 = vld [vmem:[%s281 + $0x2c] sm:$0xf]
    %v294 = vld [vmem:[%s281 + $0x30] sm:$0xf]
    %v295 = vld [vmem:[%s281 + $0x34] sm:$0xf]
    %v296 = vld [vmem:[%s281 + $0x38] sm:$0xf]
    %v297 = vld [vmem:[%s281 + $0x3c] sm:$0xf]
    %v298 = vpack.c.bf16 %v280, %v279
    %s299 = scalar_lea.vmem %s2, 2
    %v300 = vld [vmem:[%s299] sm:$0x1]
    %v302 = vlaneseq
    %v303 = vshrl.u32 %v302, 7
    %v304 = vsub.s32 0, %v303
    %v305 = vrot.slane %v300, %v304
    %v323 = vunpack.c.l.b16 %v282
    %v324 = vunpack.c.l.b16 %v283
    %v325 = vunpack.c.l.b16 %v284
    %v326 = vunpack.c.l.b16 %v285
    %v327 = vunpack.c.l.b16 %v286
    %v328 = vunpack.c.l.b16 %v287
    %v329 = vunpack.c.l.b16 %v288
    %v330 = vunpack.c.l.b16 %v289
    %v331 = vunpack.c.l.b16 %v290
    %v332 = vunpack.c.l.b16 %v291
    %v333 = vunpack.c.l.b16 %v292
    %v334 = vunpack.c.l.b16 %v293
    %v335 = vunpack.c.l.b16 %v294
    %v336 = vunpack.c.l.b16 %v295
    %v337 = vunpack.c.l.b16 %v296
    %v338 = vunpack.c.l.b16 %v297
    %v339 = vpack.c.b16 %v324, %v323
    %v340 = vpack.c.b16 %v326, %v325
    %v341 = vpack.c.b16 %v328, %v327
    %v342 = vpack.c.b16 %v330, %v329
    %v343 = vpack.c.b16 %v332, %v331
    %v344 = vpack.c.b16 %v334, %v333
    %v345 = vpack.c.b16 %v336, %v335
    %v346 = vpack.c.b16 %v338, %v337
    %355 = vmatprep.subr.bf16.mxu0 0
    %356 = vmatpush1.bf16.msra.mxu0 %v346
    %357 = vmatprep.subr.bf16.mxu0 0
    %358 = vmatpush1.bf16.msra.mxu0 %v345
    %359 = vmatprep.subr.bf16.mxu0 0
    %360 = vmatpush1.bf16.msra.mxu0 %v344
    %361 = vmatprep.subr.bf16.mxu0 0
    %362 = vmatpush1.bf16.msra.mxu0 %v343
    %363 = vmatprep.subr.bf16.mxu0 0
    %364 = vmatpush1.bf16.msra.mxu0 %v342
    %365 = vmatprep.subr.bf16.mxu0 0
    %366 = vmatpush1.bf16.msra.mxu0 %v341
    %367 = vmatprep.subr.bf16.mxu0 0
    %368 = vmatpush1.bf16.msra.mxu0 %v340
    %369 = vmatprep.subr.bf16.mxu0 0
    %370 = vmatpush1.bf16.msra.mxu0 %v339
    %371 = vmatprep.subr.bf16.mxu0 0
    %372 = vmatpush2.bf16.msra.mxu0 0
    %373 = vmatprep.subr.bf16.mxu0 0
    %374 = vmatpush2.bf16.msra.mxu0 0
    %375 = vmatprep.subr.bf16.mxu0 0
    %376 = vmatpush2.bf16.msra.mxu0 0
    %377 = vmatprep.subr.bf16.mxu0 0
    %378 = vmatpush2.bf16.msra.mxu0 0
    %379 = vmatprep.subr.bf16.mxu0 0
    %380 = vmatpush2.bf16.msra.mxu0 0
    %381 = vmatprep.subr.bf16.mxu0 0
    %382 = vmatpush2.bf16.msra.mxu0 0
    %383 = vmatprep.subr.bf16.mxu0 0
    %384 = vmatpush2.bf16.msra.mxu0 0
    %385 = vmatprep.subr.bf16.mxu0 0
    %386 = vmatpush2.bf16.msra.mxu0 0
    %387 = vmatprep.mubr.bf16.mxu0 0
    %388 = vmatmul.mubr.bf16.gmra.mxu0 %v298
    %v389 = vpop.f32.mrf.mxu0
    %v390 = vadd.f32 %v305, %v389
    %v391 = vpop.f32.mrf.mxu0
    %v392 = vpop.f32.mrf.mxu0
    %v393 = vadd.f32 %v305, %v392
    %v394 = vpop.f32.mrf.mxu0
    %395 = vdwg.mxu0
    %396 = vst [vmem:[#allocation8] sm:$0xff] %v390
    %397 = vst [vmem:[#allocation8 + $0x8] sm:$0xff] %v393
    // Predicated region
    $region22: #{tpu_custom_call.1} parent=1 // pred_check
      _
    $region23: #{tpu_custom_call.1} parent=1 // pred_check_branch
      %399 = sbr.rel (0) target = $region25
    $region24: #{tpu_custom_call.1} parent=1 // pred_region
      %s401 = ssub.s32 256, 256
      %402 = vsyncadd [#allocation5], %s401
      %s403 = sshll.u32 [#allocation8], 4
      %s404 = int_to_ptr.vmem [resolvable:$true] %s403
      %409 = dma.vmem_to_hbm [thread:$0]  %s404, 256, %s3, [#allocation5], 128, 128, 8
    $region25: #{tpu_custom_call.1} parent=1 // pred_fallthru
      _
    // Predicated region
    $region26: #{tpu_custom_call.1} parent=1 // pred_check
      _
    $region27: #{tpu_custom_call.1} parent=1 // pred_check_branch
      %411 = sbr.rel (0) target = $region29
    $region28: #{tpu_custom_call.1} parent=1 // pred_region
      %412 = dma.done [#allocation5], 256
    $region29: #{tpu_custom_call.1} parent=1 // pred_fallthru
      _
    %413 = vsyncpa [#allocation4], 1
    %414 = vsyncpa [#allocation7], 1
    %415 = vsyncpa [#allocation5], 1

</llo_original>
